<compile_context>
chip_gen: v7x
topology: tpu7x:2x2x1
jax: 0.10.0
libtpu: 0.0.40
codegen_flags: <defaults>
</compile_context>

<pallas_src>
import functools

import jax
import jax.numpy as jnp
from jax.experimental import pallas as pl
from jax.experimental.pallas import tpu as pltpu


# -----------------------------------------------------------------------------
# One-time parameter preparation (host side; amortized to zero over a sequence)
# -----------------------------------------------------------------------------
def prepare_scrn_params(W_x, b_x, U_c, V_h, alpha=0.95):
    """Pre-transpose, fold alpha into W_x/b_x, and stack U_c/V_h.

    Args (PyTorch nn.Linear layouts):
      W_x: [C, I], b_x: [C], U_c: [H, C], V_h: [H, H]
    Returns dict with:
      wx:    [I, C]   = alpha * W_x^T
      bx:    [1, C]   = alpha * b_x
      w_hid: [C+H, H] = concat(U_c^T, V_h^T) along the contraction axis
      one_minus_alpha: python float
    """
    alpha = float(alpha)
    wx = (alpha * W_x).T                                  # [I, C]
    bx = (alpha * b_x).reshape(1, -1)                     # [1, C]
    w_hid = jnp.concatenate([U_c.T, V_h.T], axis=0)       # [C+H, H]
    return {
        "wx": wx,
        "bx": bx,
        "w_hid": w_hid,
        "one_minus_alpha": 1.0 - alpha,
    }


# -----------------------------------------------------------------------------
# Single-step kernel (matches SCRNCell.forward exactly).
# NOTE: do NOT drive sequences through this in an outer loop/scan — each call
# re-DMAs the weights and pays full launch overhead; use scrn_sequence instead.
# -----------------------------------------------------------------------------
def _scrn_step_kernel(x_ref, h_ref, c_ref, wx_ref, bx_ref, whid_ref,
                      h_out_ref, c_out_ref, *, one_minus_alpha):
    x = x_ref[...].astype(jnp.float32)            # [B, I]
    h_prev = h_ref[...].astype(jnp.float32)       # [B, H]
    c_prev = c_ref[...].astype(jnp.float32)       # [B, C]

    # Context update (alpha pre-folded into wx / bx on the host).
    c_t = one_minus_alpha * c_prev + (
        jnp.dot(x, wx_ref[...], preferred_element_type=jnp.float32) + bx_ref[...]
    )

    # Hidden update: single fused contraction over [c_t, h_prev].
    ch = jnp.concatenate([c_t, h_prev], axis=-1)  # [B, C+H]
    h_t = jnp.tanh(
        jnp.dot(ch, whid_ref[...], preferred_element_type=jnp.float32)
    )

    h_out_ref[...] = h_t.astype(h_out_ref.dtype)
    c_out_ref[...] = c_t.astype(c_out_ref.dtype)


def scrn_cell(x_t, h_prev, c_prev, params):
    """Pallas-backed single-step SCRN cell.

    x_t: [B, I], h_prev: [B, H], c_prev: [B, C]; params from prepare_scrn_params.
    Returns (h_t, c_t).
    """
    B = x_t.shape[0]
    C = params["wx"].shape[1]
    H = params["w_hid"].shape[1]

    kernel = functools.partial(
        _scrn_step_kernel, one_minus_alpha=float(params["one_minus_alpha"])
    )
    vmem = pl.BlockSpec(memory_space=pltpu.MemorySpace.VMEM)

    h_t, c_t = pl.pallas_call(
        kernel,
        out_shape=(
            jax.ShapeDtypeStruct((B, H), x_t.dtype),
            jax.ShapeDtypeStruct((B, C), x_t.dtype),
        ),
        in_specs=[vmem] * 6,
        out_specs=(vmem, vmem),
    )(x_t, h_prev, c_prev, params["wx"], params["bx"], params["w_hid"])
    return h_t, c_t


# -----------------------------------------------------------------------------
# Hoisted input projection: ONE big [T*B, I] x [I, C] MXU matmul.
# -----------------------------------------------------------------------------
def _input_proj_kernel(x_ref, wx_ref, bx_ref, o_ref):
    o_ref[...] = (
        jnp.dot(x_ref[...].astype(jnp.float32), wx_ref[...],
                preferred_element_type=jnp.float32)
        + bx_ref[...]
    ).astype(o_ref.dtype)


def _input_projection(xs, wx, bx):
    """px = alpha*(x @ W_x^T + b_x) for the whole sequence (time-local work)."""
    T, B, I = xs.shape
    C = wx.shape[1]
    rows = T * B
    x2d = xs.reshape(rows, I)
    # TODO(synk): pad `rows` to a multiple of the row tile for large,
    # non-divisible T*B; at demo sizes a single resident block is optimal.
    tm = 256 if rows % 256 == 0 else rows

    px = pl.pallas_call(
        _input_proj_kernel,
        out_shape=jax.ShapeDtypeStruct((rows, C), jnp.float32),
        grid_spec=pltpu.PrefetchScalarGridSpec(
            num_scalar_prefetch=0,
            grid=(rows // tm,),
            in_specs=[
                pl.BlockSpec((tm, I), lambda i: (i, 0)),
                pl.BlockSpec((I, C), lambda i: (0, 0)),
                pl.BlockSpec((1, C), lambda i: (0, 0)),
            ],
            out_specs=pl.BlockSpec((tm, C), lambda i: (i, 0)),
        ),
        compiler_params=pltpu.CompilerParams(
            dimension_semantics=("parallel",),
        ),
    )(x2d, wx, bx)
    return px.reshape(T, B, C)


# -----------------------------------------------------------------------------
# Sequence kernel: time chunked into the grid, weights resident in VMEM,
# recurrent state carried in a persistent (B, C+H) f32 VMEM slab.
# -----------------------------------------------------------------------------
def _scrn_seq_kernel(px_ref, h0_ref, c0_ref, whid_ref, hs_ref, cs_ref, ch_sc,
                     *, one_minus_alpha, chunk, C, H):
    n = pl.program_id(1)  # time-chunk index (innermost, "arbitrary")

    @pl.when(n == 0)
    def _init():
        # Slab layout: columns [0:C] hold the context state, [C:C+H] the hidden.
        ch_sc[:, :C] = c0_ref[...].astype(jnp.float32)
        ch_sc[:, C:] = h0_ref[...].astype(jnp.float32)

    w_hid = whid_ref[...]  # resident [C+H, H]

    # Fully unrolled inner time loop: static lane offsets for every slab /
    # output write; per step = one MXU dot + VPU blend + EUP tanh.
    for s in range(chunk):
        px = px_ref[s].astype(jnp.float32)               # [Bb, C] (alpha*Wx*x+b)
        c_t = one_minus_alpha * ch_sc[:, :C] + px        # context EMA (f32)
        ch_sc[:, :C] = c_t                               # slab = [c_t, h_prev]
        h_t = jnp.tanh(jnp.dot(ch_sc[...], w_hid,
                               preferred_element_type=jnp.float32))
        ch_sc[:, C:] = h_t                               # slab = [c_t, h_t]

        # Packed, lane-dense per-chunk outputs: one (Bb, chunk*H)/(Bb, chunk*C)
        # block DMA per grid step instead of `chunk` narrow partial writebacks.
        hs_ref[0, :, s * H:(s + 1) * H] = h_t.astype(hs_ref.dtype)
        cs_ref[0, :, s * C:(s + 1) * C] = c_t.astype(cs_ref.dtype)


def scrn_sequence(xs, h0, c0, params, *, max_time_chunk=8):
    """Run the SCRN cell over a full sequence.

    xs: [T, B, I], h0: [B, H], c0: [B, C]; params from prepare_scrn_params.
    Returns (hs [T, B, H], cs [T, B, C]) — the per-step hidden / context states.
    """
    T, B, I = xs.shape
    C = params["wx"].shape[1]
    H = params["w_hid"].shape[1]
    CH = C + H

    # Time chunk (amortizes the ~0.35 us per-grid-step overhead).
    chunk = 1
    for cand in (max_time_chunk, 8, 4, 2, 1):
        if cand and T % cand == 0:
            chunk = cand
            break
    nc = T // chunk

    # Leading "parallel" batch axis (v7x megacore). Only when each batch block
    # still has >= 8 sublanes; no-op at small B and on single-TC chips.
    nb = 2 if (B % 16 == 0) else 1
    bb = B // nb

    # (1) Hoisted, batched input projection (alpha and bias folded in).
    px = _input_projection(xs, params["wx"], params["bx"])      # [T, B, C] f32

    # (2) Recurrence over time, chunked.
    kernel = functools.partial(
        _scrn_seq_kernel,
        one_minus_alpha=float(params["one_minus_alpha"]),
        chunk=chunk, C=C, H=H,
    )

    hs_packed, cs_packed = pl.pallas_call(
        kernel,
        out_shape=(
            jax.ShapeDtypeStruct((nc, B, chunk * H), xs.dtype),
            jax.ShapeDtypeStruct((nc, B, chunk * C), xs.dtype),
        ),
        grid_spec=pltpu.PrefetchScalarGridSpec(
            num_scalar_prefetch=0,
            grid=(nb, nc),
            in_specs=[
                pl.BlockSpec((chunk, bb, C), lambda b, n: (n, b, 0)),  # px chunk
                pl.BlockSpec((bb, H), lambda b, n: (b, 0)),            # h0
                pl.BlockSpec((bb, C), lambda b, n: (b, 0)),            # c0
                pl.BlockSpec((CH, H), lambda b, n: (0, 0)),            # w_hid (resident)
            ],
            out_specs=(
                pl.BlockSpec((1, bb, chunk * H), lambda b, n: (n, b, 0)),
                pl.BlockSpec((1, bb, chunk * C), lambda b, n: (n, b, 0)),
            ),
            scratch_shapes=[
                pltpu.VMEM((bb, CH), jnp.float32),  # persistent [c, h] slab carry
            ],
        ),
        compiler_params=pltpu.CompilerParams(
            dimension_semantics=("parallel", "arbitrary"),
        ),
    )(px, h0, c0, params["w_hid"])

    # (3) Unpack the lane-dense per-chunk slabs back to [T, B, *].
    hs = hs_packed.reshape(nc, B, chunk, H).transpose(0, 2, 1, 3).reshape(T, B, H)
    cs = cs_packed.reshape(nc, B, chunk, C).transpose(0, 2, 1, 3).reshape(T, B, C)
    return hs, cs


# -----------------------------------------------------------------------------
# Demo / correctness check
# -----------------------------------------------------------------------------
if __name__ == "__main__":
    batch = 8
    input_size = 16
    hidden_size = 32
    context_size = 32
    seq_len = 16          # -> 2 time chunks of 8: exercises the cross-chunk carry
    alpha = 0.95

    key = jax.random.PRNGKey(0)
    keys = jax.random.split(key, 8)

    # Parameters in PyTorch nn.Linear layout.
    W_x = jax.random.normal(keys[0], (context_size, input_size), jnp.float32) * 0.1
    b_x = jax.random.normal(keys[1], (context_size,), jnp.float32) * 0.1
    U_c = jax.random.normal(keys[2], (hidden_size, context_size), jnp.float32) * 0.1
    V_h = jax.random.normal(keys[3], (hidden_size, hidden_size), jnp.float32) * 0.1

    # Inputs.
    x_t = jax.random.normal(keys[4], (batch, input_size), jnp.float32)
    h_prev = jax.random.normal(keys[5], (batch, hidden_size), jnp.float32)
    c_prev = jax.random.normal(keys[6], (batch, context_size), jnp.float32)
    xs = jax.random.normal(keys[7], (seq_len, batch, input_size), jnp.float32)

    # One-time weight prep (hoisted out of the per-step path).
    params = prepare_scrn_params(W_x, b_x, U_c, V_h, alpha=alpha)

    # --- Single-step cell (matches SCRNCell.forward) -------------------------
    h_t, c_t = scrn_cell(x_t, h_prev, c_prev, params)
    jax.block_until_ready((h_t, c_t))

    c_ref = (1.0 - alpha) * c_prev + alpha * (x_t @ W_x.T + b_x)
    h_ref = jnp.tanh(c_ref @ U_c.T + h_prev @ V_h.T)
    assert jnp.allclose(c_t, c_ref, atol=1e-5, rtol=1e-5)
    assert jnp.allclose(h_t, h_ref, atol=1e-5, rtol=1e-5)

    # --- Sequence kernel (hoisted projection + chunked recurrence) -----------
    hs, cs = scrn_sequence(xs, h_prev, c_prev, params)
    jax.block_until_ready((hs, cs))

    h_r, c_r = h_prev, c_prev
    for t in range(seq_len):
        c_r = (1.0 - alpha) * c_r + alpha * (xs[t] @ W_x.T + b_x)
        h_r = jnp.tanh(c_r @ U_c.T + h_r @ V_h.T)
        assert jnp.allclose(cs[t], c_r, atol=1e-4, rtol=1e-4)
        assert jnp.allclose(hs[t], h_r, atol=1e-4, rtol=1e-4)

    print("KERNEL_OK")
</pallas_src>

<mosaic_0001>
module attributes {stable_mosaic.version = 11 : i64} {
  func.func @_scrn_step_kernel(%arg0: memref<8x16xf32, #tpu.memory_space<vmem>>, %arg1: memref<8x32xf32, #tpu.memory_space<vmem>>, %arg2: memref<8x32xf32, #tpu.memory_space<vmem>>, %arg3: memref<16x32xf32, #tpu.memory_space<vmem>>, %arg4: memref<1x32xf32, #tpu.memory_space<vmem>>, %arg5: memref<64x32xf32, #tpu.memory_space<vmem>>, %arg6: memref<8x32xf32, #tpu.memory_space<vmem>>, %arg7: memref<8x32xf32, #tpu.memory_space<vmem>>) attributes {dimension_semantics = [], scalar_prefetch = 0 : i64, scratch_operands = 0 : i64, tpu.core_type = #tpu.core_type<tc>} {
    %c0 = arith.constant 0 : index
    %c0_0 = arith.constant 0 : index
    %0 = vector.load %arg0[%c0, %c0_0] : memref<8x16xf32, #tpu.memory_space<vmem>>, vector<8x16xf32>
    %c0_1 = arith.constant 0 : index
    %c0_2 = arith.constant 0 : index
    %1 = vector.load %arg1[%c0_1, %c0_2] : memref<8x32xf32, #tpu.memory_space<vmem>>, vector<8x32xf32>
    %c0_3 = arith.constant 0 : index
    %c0_4 = arith.constant 0 : index
    %2 = vector.load %arg2[%c0_3, %c0_4] : memref<8x32xf32, #tpu.memory_space<vmem>>, vector<8x32xf32>
    %cst = arith.constant 5.000000e-02 : f32
    %3 = vector.broadcast %cst : f32 to vector<8x32xf32>
    %4 = arith.mulf %3, %2 : vector<8x32xf32>
    %c0_5 = arith.constant 0 : index
    %c0_6 = arith.constant 0 : index
    %5 = vector.load %arg3[%c0_5, %c0_6] : memref<16x32xf32, #tpu.memory_space<vmem>>, vector<16x32xf32>
    %cst_7 = arith.constant dense<0.000000e+00> : vector<8x32xf32>
    %6 = tpu.matmul %0, %5, %cst_7 {dimension_numbers = #tpu.dot_dimension_numbers<[1], [0], [0], [1], [0, 0, 1, 1], [], []>} : vector<8x16xf32>, vector<16x32xf32>, vector<8x32xf32> -> vector<8x32xf32>
    %c0_8 = arith.constant 0 : index
    %c0_9 = arith.constant 0 : index
    %7 = vector.load %arg4[%c0_8, %c0_9] : memref<1x32xf32, #tpu.memory_space<vmem>>, vector<1x32xf32>
    %8 = vector.broadcast %7 : vector<1x32xf32> to vector<8x32xf32>
    %9 = arith.addf %6, %8 : vector<8x32xf32>
    %10 = arith.addf %4, %9 : vector<8x32xf32>
    %11 = tpu.concatenate %10, %1 in 1 : vector<8x32xf32>, vector<8x32xf32> -> vector<8x64xf32>
    %c0_10 = arith.constant 0 : index
    %c0_11 = arith.constant 0 : index
    %12 = vector.load %arg5[%c0_10, %c0_11] : memref<64x32xf32, #tpu.memory_space<vmem>>, vector<64x32xf32>
    %cst_12 = arith.constant dense<0.000000e+00> : vector<8x32xf32>
    %13 = tpu.matmul %11, %12, %cst_12 {dimension_numbers = #tpu.dot_dimension_numbers<[1], [0], [0], [1], [0, 0, 1, 1], [], []>} : vector<8x64xf32>, vector<64x32xf32>, vector<8x32xf32> -> vector<8x32xf32>
    %14 = math.tanh %13 : vector<8x32xf32>
    %c0_13 = arith.constant 0 : index
    %c0_14 = arith.constant 0 : index
    %15 = vector.load %arg6[%c0_13, %c0_14] : memref<8x32xf32, #tpu.memory_space<vmem>>, vector<8x32xf32>
    tpu.vector_store %arg6[%c0_13, %c0_14], %14 {strides = array<i32>} : memref<8x32xf32, #tpu.memory_space<vmem>>, vector<8x32xf32>,
    %c0_15 = arith.constant 0 : index
    %c0_16 = arith.constant 0 : index
    %16 = vector.load %arg7[%c0_15, %c0_16] : memref<8x32xf32, #tpu.memory_space<vmem>>, vector<8x32xf32>
    tpu.vector_store %arg7[%c0_15, %c0_16], %10 {strides = array<i32>} : memref<8x32xf32, #tpu.memory_space<vmem>>, vector<8x32xf32>,
    return
  }
}

</mosaic_0001>

<llo_original>
// kernel: tpu_custom_call.1
$region0: #{tpu_custom_call.1}
  #allocation0 [shape = 'u32[]', space=smem, size = 0x4, offset = 0x4, fixed_abs, tag = 'smem constant byte address 0x4 - core index']
  #allocation1 [shape = 'u32[144,128]{1,0:T(1,128)}', space=vmem, size = 0x12000, scoped, tag = 'internal scratch']
  %s0 = inlined_call_operand.vmem [shape: f32[8,16], index: 0, kind: input, shape index: {}]
  %s1 = inlined_call_operand.vmem [shape: f32[8,32], index: 1, kind: input, shape index: {}]
  %s2 = inlined_call_operand.vmem [shape: f32[8,32], index: 2, kind: input, shape index: {}]
  %s3 = inlined_call_operand.vmem [shape: f32[16,32], index: 3, kind: input, shape index: {}]
  %s4 = inlined_call_operand.vmem [shape: f32[1,32], index: 4, kind: input, shape index: {}]
  %s5 = inlined_call_operand.vmem [shape: f32[64,32], index: 5, kind: input, shape index: {}]
  %s6 = inlined_call_operand.hbm [shape: f32[8,32], index: 6, kind: output, shape index: {0}]
  %s7 = inlined_call_operand.hbm [shape: f32[8,32], index: 7, kind: output, shape index: {1}]
  %8 = xla_tuple %s6, %s7
  %s9 = sld [smem:[#allocation0]]
  $region42: #{tpu_custom_call.1} parent=0
    _
  %s11 = ssub.s32 1, %s9
  %s12 = scalar_select 0, %s11, %s9
  $region1: #{tpu_custom_call.1} parent=0
    #allocation2 [shape = 'u8[4096]{0}', space=vmem, size = 0x1000, scoped, tag = 'output window, operand 0, single buffered']
    #allocation3 [shape = 's32[1]{0}', space=sflag, size = 0x4, scoped, tag = 'scoped memory for tpu_custom_call.1']
    #allocation4 [shape = 'u8[4096]{0}', space=vmem, size = 0x1000, scoped, tag = 'output window, operand 1, single buffered']
    #allocation5 [shape = 's32[1]{0}', space=sflag, size = 0x4, scoped, tag = 'scoped memory for tpu_custom_call.1']
    %13 = vsyncpa [#allocation3], 0
    %14 = vsyncpa [#allocation5], 0
    // Predicated region
    $region2: #{tpu_custom_call.1} parent=1 // pred_check
      _
    $region3: #{tpu_custom_call.1} parent=1 // pred_check_branch
      %16 = sbr.rel (0) target = $region5
    $region4: #{tpu_custom_call.1} parent=1 // pred_region
      _
    $region5: #{tpu_custom_call.1} parent=1 // pred_fallthru
      _
    // Predicated region
    $region6: #{tpu_custom_call.1} parent=1 // pred_check
      _
    $region7: #{tpu_custom_call.1} parent=1 // pred_check_branch
      %18 = sbr.rel (0) target = $region9
    $region8: #{tpu_custom_call.1} parent=1 // pred_region
      _
    $region9: #{tpu_custom_call.1} parent=1 // pred_fallthru
      _
    // Predicated region
    $region10: #{tpu_custom_call.1} parent=1 // pred_check
      _
    $region11: #{tpu_custom_call.1} parent=1 // pred_check_branch
      %20 = sbr.rel (0) target = $region13
    $region12: #{tpu_custom_call.1} parent=1 // pred_region
      _
    $region13: #{tpu_custom_call.1} parent=1 // pred_fallthru
      _
    // Predicated region
    $region14: #{tpu_custom_call.1} parent=1 // pred_check
      _
    $region15: #{tpu_custom_call.1} parent=1 // pred_check_branch
      %22 = sbr.rel (0) target = $region17
    $region16: #{tpu_custom_call.1} parent=1 // pred_region
      _
    $region17: #{tpu_custom_call.1} parent=1 // pred_fallthru
      _
    // Predicated region
    $region18: #{tpu_custom_call.1} parent=1 // pred_check
      _
    $region19: #{tpu_custom_call.1} parent=1 // pred_check_branch
      %24 = sbr.rel (0) target = $region21
    $region20: #{tpu_custom_call.1} parent=1 // pred_region
      _
    $region21: #{tpu_custom_call.1} parent=1 // pred_fallthru
      _
    // Predicated region
    $region22: #{tpu_custom_call.1} parent=1 // pred_check
      _
    $region23: #{tpu_custom_call.1} parent=1 // pred_check_branch
      %26 = sbr.rel (0) target = $region25
    $region24: #{tpu_custom_call.1} parent=1 // pred_region
      _
    $region25: #{tpu_custom_call.1} parent=1 // pred_fallthru
      _
    %v27 = vld [vmem:[%s0] sm:$0xff]
    %v28 = vld [vmem:[%s1] sm:$0xff]
    %v29 = vld [vmem:[%s2] sm:$0xff]
    %v30 = vmul.f32 %v29, 0.05
    %v31 = vld [vmem:[%s3] sm:$0xff]
    %v32 = vld [vmem:[%s3 + $0x8] sm:$0xff]
    %v33 = vld [vmem:[%s4] sm:$0x1]
    %v35 = vlaneseq
    %v36 = vshrl.u32 %v35, 7
    %v37 = vsub.s32 0, %v36
    %v38 = vrot.slane %v33, %v37
    %vm40 = vcmask 130048
    %v42 = vsel %vm40, %v27, 0
    %44 = vmatprep.subr.mxu0 0.0
    %45 = vmatpush1.msra.mxu0 %v31
    %46 = vmatprep.subr.mxu0 0.0
    %47 = vmatpush1.msra.mxu0 %v32
    %48 = vmatprep.subr.mxu0 0.0
    %49 = vmatpush1.msra.mxu0 0.0
    %50 = vmatprep.subr.mxu0 0.0
    %51 = vmatpush1.msra.mxu0 0.0
    %52 = vmatprep.subr.mxu0 0.0
    %53 = vmatpush1.msra.mxu0 0.0
    %54 = vmatprep.subr.mxu0 0.0
    %55 = vmatpush1.msra.mxu0 0.0
    %56 = vmatprep.subr.mxu0 0.0
    %57 = vmatpush1.msra.mxu0 0.0
    %58 = vmatprep.subr.mxu0 0.0
    %59 = vmatpush1.msra.mxu0 0.0
    %60 = vmatprep.subr.mxu0 0.0
    %61 = vmatpush1.msra.mxu0 0.0
    %62 = vmatprep.subr.mxu0 0.0
    %63 = vmatpush1.msra.mxu0 0.0
    %64 = vmatprep.subr.mxu0 0.0
    %65 = vmatpush1.msra.mxu0 0.0
    %66 = vmatprep.subr.mxu0 0.0
    %67 = vmatpush1.msra.mxu0 0.0
    %68 = vmatprep.subr.mxu0 0.0
    %69 = vmatpush1.msra.mxu0 0.0
    %70 = vmatprep.subr.mxu0 0.0
    %71 = vmatpush1.msra.mxu0 0.0
    %72 = vmatprep.subr.mxu0 0.0
    %73 = vmatpush1.msra.mxu0 0.0
    %74 = vmatprep.subr.mxu0 0.0
    %75 = vmatpush1.msra.mxu0 0.0
    %76 = vmatprep.subr.mxu0 0.0
    %77 = vmatpush1.msra.mxu0 0.0
    %78 = vmatprep.subr.mxu0 0.0
    %79 = vmatpush1.msra.mxu0 0.0
    %80 = vmatprep.subr.mxu0 0.0
    %81 = vmatpush1.msra.mxu0 0.0
    %82 = vmatprep.subr.mxu0 0.0
    %83 = vmatpush1.msra.mxu0 0.0
    %84 = vmatprep.subr.mxu0 0.0
    %85 = vmatpush1.msra.mxu0 0.0
    %86 = vmatprep.subr.mxu0 0.0
    %87 = vmatpush1.msra.mxu0 0.0
    %88 = vmatprep.subr.mxu0 0.0
    %89 = vmatpush1.msra.mxu0 0.0
    %90 = vmatprep.subr.mxu0 0.0
    %91 = vmatpush1.msra.mxu0 0.0
    %92 = vmatprep.subr.mxu0 0.0
    %93 = vmatpush1.msra.mxu0 0.0
    %94 = vmatprep.subr.mxu0 0.0
    %95 = vmatpush1.msra.mxu0 0.0
    %96 = vmatprep.subr.mxu0 0.0
    %97 = vmatpush1.msra.mxu0 0.0
    %98 = vmatprep.subr.mxu0 0.0
    %99 = vmatpush1.msra.mxu0 0.0
    %100 = vmatprep.subr.mxu0 0.0
    %101 = vmatpush1.msra.mxu0 0.0
    %102 = vmatprep.subr.mxu0 0.0
    %103 = vmatpush1.msra.mxu0 0.0
    %104 = vmatprep.subr.mxu0 0.0
    %105 = vmatpush1.msra.mxu0 0.0
    %106 = vmatprep.subr.mxu0 0.0
    %107 = vmatpush1.msra.mxu0 0.0
    %108 = vmatprep.mubr.f32.mxu0 0.0
    %109 = vmatmul.mubr.f32.gmra.mrb[0].mxu0 %v42
    %v110 = vpop.f32.mrb[0].mxu0
    %v111 = vadd.f32 %v38, %v110
    %v112 = vpop.f32.mrb[0].mxu0
    %113 = vdwg.mxu0
    %v114 = vadd.f32 %v30, %v111
    %116 = vrot.lane.b32.xlu0 %v28, 32
    %v117 = vpop.permute.xlu0 %116
    %vm119 = vcmask 261120
    %v120 = vsel %vm119, %v114, %v117
    %v121 = vld [vmem:[%s5] sm:$0xff]
    %v122 = vld [vmem:[%s5 + $0x8] sm:$0xff]
    %v123 = vld [vmem:[%s5 + $0x10] sm:$0xff]
    %v124 = vld [vmem:[%s5 + $0x18] sm:$0xff]
    %v125 = vld [vmem:[%s5 + $0x20] sm:$0xff]
    %v126 = vld [vmem:[%s5 + $0x28] sm:$0xff]
    %v127 = vld [vmem:[%s5 + $0x30] sm:$0xff]
    %v128 = vld [vmem:[%s5 + $0x38] sm:$0xff]
    %vm129 = vcmask 523264
    %v131 = vsel %vm129, %v120, 0
    %133 = vmatprep.subr.mxu0 0.0
    %134 = vmatpush1.msra.mxu0 %v121
    %135 = vmatprep.subr.mxu0 0.0
    %136 = vmatpush1.msra.mxu0 %v122
    %137 = vmatprep.subr.mxu0 0.0
    %138 = vmatpush1.msra.mxu0 %v123
    %139 = vmatprep.subr.mxu0 0.0
    %140 = vmatpush1.msra.mxu0 %v124
    %141 = vmatprep.subr.mxu0 0.0
    %142 = vmatpush1.msra.mxu0 %v125
    %143 = vmatprep.subr.mxu0 0.0
    %144 = vmatpush1.msra.mxu0 %v126
    %145 = vmatprep.subr.mxu0 0.0
    %146 = vmatpush1.msra.mxu0 %v127
    %147 = vmatprep.subr.mxu0 0.0
    %148 = vmatpush1.msra.mxu0 %v128
    %149 = vmatprep.subr.mxu0 0.0
    %150 = vmatpush1.msra.mxu0 0.0
    %151 = vmatprep.subr.mxu0 0.0
    %152 = vmatpush1.msra.mxu0 0.0
    %153 = vmatprep.subr.mxu0 0.0
    %154 = vmatpush1.msra.mxu0 0.0
    %155 = vmatprep.subr.mxu0 0.0
    %156 = vmatpush1.msra.mxu0 0.0
    %157 = vmatprep.subr.mxu0 0.0
    %158 = vmatpush1.msra.mxu0 0.0
    %159 = vmatprep.subr.mxu0 0.0
    %160 = vmatpush1.msra.mxu0 0.0
    %161 = vmatprep.subr.mxu0 0.0
    %162 = vmatpush1.msra.mxu0 0.0
    %163 = vmatprep.subr.mxu0 0.0
    %164 = vmatpush1.msra.mxu0 0.0
    %165 = vmatprep.subr.mxu0 0.0
    %166 = vmatpush1.msra.mxu0 0.0
    %167 = vmatprep.subr.mxu0 0.0
    %168 = vmatpush1.msra.mxu0 0.0
    %169 = vmatprep.subr.mxu0 0.0
    %170 = vmatpush1.msra.mxu0 0.0
    %171 = vmatprep.subr.mxu0 0.0
    %172 = vmatpush1.msra.mxu0 0.0
    %173 = vmatprep.subr.mxu0 0.0
    %174 = vmatpush1.msra.mxu0 0.0
    %175 = vmatprep.subr.mxu0 0.0
    %176 = vmatpush1.msra.mxu0 0.0
    %177 = vmatprep.subr.mxu0 0.0
    %178 = vmatpush1.msra.mxu0 0.0
    %179 = vmatprep.subr.mxu0 0.0
    %180 = vmatpush1.msra.mxu0 0.0
    %181 = vmatprep.subr.mxu0 0.0
    %182 = vmatpush1.msra.mxu0 0.0
    %183 = vmatprep.subr.mxu0 0.0
    %184 = vmatpush1.msra.mxu0 0.0
    %185 = vmatprep.subr.mxu0 0.0
    %186 = vmatpush1.msra.mxu0 0.0
    %187 = vmatprep.subr.mxu0 0.0
    %188 = vmatpush1.msra.mxu0 0.0
    %189 = vmatprep.subr.mxu0 0.0
    %190 = vmatpush1.msra.mxu0 0.0
    %191 = vmatprep.subr.mxu0 0.0
    %192 = vmatpush1.msra.mxu0 0.0
    %193 = vmatprep.subr.mxu0 0.0
    %194 = vmatpush1.msra.mxu0 0.0
    %195 = vmatprep.subr.mxu0 0.0
    %196 = vmatpush1.msra.mxu0 0.0
    %197 = vmatprep.mubr.f32.mxu0 0.0
    %198 = vmatmul.mubr.f32.gmra.mrb[0].mxu0 %v131
    %v199 = vpop.f32.mrb[0].mxu0
    %v200 = vadd.f32 0.0, %v199
    %v201 = vpop.f32.mrb[0].mxu0
    %202 = vdwg.mxu0
    %v203 = vtanh.pop %v200
    %204 = vst.msk [vmem:[#allocation2] sm:$0xff] %vm119, %v203
    %205 = vst.msk [vmem:[#allocation4] sm:$0xff] %vm119, %v114
    // Predicated region
    $region26: #{tpu_custom_call.1} parent=1 // pred_check
      _
    $region27: #{tpu_custom_call.1} parent=1 // pred_check_branch
      %207 = sbr.rel (0) target = $region29
    $region28: #{tpu_custom_call.1} parent=1 // pred_region
      %s209 = ssub.s32 128, 128
      %210 = vsyncadd [#allocation3], %s209
      %s212 = sshll.u32 [#allocation2], 4
      %s213 = int_to_ptr.vmem [resolvable:$true] %s212
      %215 = dma.vmem_to_hbm [thread:$0]  %s213, 128, %s6, [#allocation3]
    $region29: #{tpu_custom_call.1} parent=1 // pred_fallthru
      _
    // Predicated region
    $region30: #{tpu_custom_call.1} parent=1 // pred_check
      _
    $region31: #{tpu_custom_call.1} parent=1 // pred_check_branch
      %217 = sbr.rel (0) target = $region33
    $region32: #{tpu_custom_call.1} parent=1 // pred_region
      %s219 = ssub.s32 128, 128
      %220 = vsyncadd [#allocation5], %s219
      %s222 = sshll.u32 [#allocation4], 4
      %s223 = int_to_ptr.vmem [resolvable:$true] %s222
      %225 = dma.vmem_to_hbm [thread:$0]  %s223, 128, %s7, [#allocation5]
    $region33: #{tpu_custom_call.1} parent=1 // pred_fallthru
      _
    // Predicated region
    $region34: #{tpu_custom_call.1} parent=1 // pred_check
      _
    $region35: #{tpu_custom_call.1} parent=1 // pred_check_branch
      %227 = sbr.rel (0) target = $region37
    $region36: #{tpu_custom_call.1} parent=1 // pred_region
      %228 = dma.done [#allocation3], 128
    $region37: #{tpu_custom_call.1} parent=1 // pred_fallthru
      _
    // Predicated region
    $region38: #{tpu_custom_call.1} parent=1 // pred_check
      _
    $region39: #{tpu_custom_call.1} parent=1 // pred_check_branch
      %230 = sbr.rel (0) target = $region41
    $region40: #{tpu_custom_call.1} parent=1 // pred_region
      %231 = dma.done [#allocation5], 128
    $region41: #{tpu_custom_call.1} parent=1 // pred_fallthru
      _
    %232 = vsyncpa [#allocation3], 1
    %233 = vsyncpa [#allocation5], 1

</llo_original>
